<compile_context>
chip_gen: v5e
topology: v5e:2x2
jax: 0.10.0
libtpu: 0.0.40
codegen_flags: <defaults>
</compile_context>

<pallas_src>
import functools

import jax
import jax.numpy as jnp
from jax.experimental import pallas as pl
from jax.experimental.pallas import tpu as pltpu


# ----------------------------------------------------------------------------
# Hardware-aware VMEM sizing
# ----------------------------------------------------------------------------
def _hw_vmem():
    """Return (vmem_budget, vmem_limit_bytes, two_tensorcores)."""
    try:
        cap = int(pltpu.get_tpu_info().vmem_capacity_bytes)
    except Exception:
        cap = 64 * 1024 * 1024            # conservative fallback: v7x-sized VMEM
    two_tc = cap <= 80 * 1024 * 1024      # 64 MiB/TC parts (v7x) have 2 TCs/chip
    if two_tc:
        vmem_limit = min(cap * 3 // 4, 48 * 1024 * 1024)
        vmem_budget = min(28 * 1024 * 1024, vmem_limit * 2 // 3)
    else:                                 # 128 MiB parts: v5e / v6e
        vmem_limit = 64 * 1024 * 1024
        vmem_budget = 40 * 1024 * 1024
    return vmem_budget, vmem_limit, two_tc


# ----------------------------------------------------------------------------
# Kernel bodies
# ----------------------------------------------------------------------------
def _store_features(out_ref, s0, s1, s2, s3, s4, s5):
    """Direct per-feature column stores (no concatenate / lane shuffle)."""
    out_ref[:, 0:1] = s0
    out_ref[:, 1:2] = s1
    out_ref[:, 2:3] = s2
    out_ref[:, 3:4] = s3
    out_ref[:, 4:5] = s4
    # NOTE: s5 = sum(exp(p-1)); can reach +inf in f32 for p >~ 89, matching
    # the f32 reference semantics.
    out_ref[:, 5:6] = jnp.log(jnp.exp(jnp.float32(-1.0)) + s5) + jnp.float32(1.0)


def _kernel_single(b_ref, d_ref, out_ref):
    """L fits in one block: compute and store directly (no scratch)."""
    b = b_ref[...].astype(jnp.float32)
    d = d_ref[...].astype(jnp.float32)
    p = jnp.abs(d - b)
    logp = jnp.log1p(p)
    s0 = jnp.sum(p, axis=-1, keepdims=True)
    s1 = jnp.sum(b * p, axis=-1, keepdims=True)
    s2 = jnp.sum(d * p, axis=-1, keepdims=True)
    s3 = jnp.sum(b * logp, axis=-1, keepdims=True)
    s4 = jnp.sum(d * logp, axis=-1, keepdims=True)
    s5 = jnp.sum(jnp.where(p > 0.0, jnp.exp(p - 1.0), 0.0),
                 axis=-1, keepdims=True)
    _store_features(out_ref, s0, s1, s2, s3, s4, s5)


def _lane_partials(b, d, tile_l):
    """Fold a (tile_n, tile_l) tile into six (tile_n, 128) lane-width partials
    using only VPU adds; the cross-lane (XLU) reduce is deferred to finalize."""
    n_chunks = max(tile_l // 128, 1)
    parts = None
    for c in range(n_chunks):
        sl = slice(c * 128, (c + 1) * 128)
        bc = b[:, sl]
        dc = d[:, sl]
        p = jnp.abs(dc - bc)
        logp = jnp.log1p(p)
        cur = (p, bc * p, dc * p, bc * logp, dc * logp,
               jnp.where(p > 0.0, jnp.exp(p - 1.0), 0.0))
        parts = cur if parts is None else tuple(
            x + y for x, y in zip(parts, cur))
    return parts


def _kernel_tiled(b_ref, d_ref, out_ref, a0, a1, a2, a3, a4, a5, *, tile_l, L):
    """L tiled along the innermost ('arbitrary') grid axis; lane-width
    accumulators live in VMEM scratch and are reduced once at k == last."""
    k = pl.program_id(1)
    nk = pl.num_programs(1)
    accs = (a0, a1, a2, a3, a4, a5)

    @pl.when(k == 0)
    def _():
        for a in accs:
            a[...] = jnp.zeros_like(a)

    b = b_ref[...].astype(jnp.float32)
    d = d_ref[...].astype(jnp.float32)

    def accumulate(bb, dd):
        for a, s in zip(accs, _lane_partials(bb, dd, tile_l)):
            a[...] += s

    if L % tile_l != 0:
        # Out-of-range lanes exist only in the very last L block; mask only
        # there so all other inner iterations stay mask-free.
        @pl.when(k < nk - 1)
        def _():
            accumulate(b, d)

        @pl.when(k == nk - 1)
        def _():
            col = jax.lax.broadcasted_iota(jnp.int32, b.shape, 1)
            valid = (k * tile_l + col) < L
            zero = jnp.zeros_like(b)
            accumulate(jnp.where(valid, b, zero), jnp.where(valid, d, zero))
    else:
        accumulate(b, d)

    @pl.when(k == nk - 1)
    def _():
        sums = [jnp.sum(a[...], axis=-1, keepdims=True) for a in accs]
        _store_features(out_ref, *sums)


# ----------------------------------------------------------------------------
# Tiling heuristics
# ----------------------------------------------------------------------------
def _choose_tiles(N, L, itemsize, *, max_tile_l, vmem_budget, two_tc):
    """Pick (tile_n, tile_l, n_l_blocks) to fit the resident VMEM budget."""
    if L <= max_tile_l:
        tile_l, n_l_blocks = L, 1
    else:
        tile_l = max_tile_l                       # multiple of 128
        n_l_blocks = pl.cdiv(L, tile_l)

    row_align = 16 if itemsize == 2 else 8
    lane_pad = max(pl.cdiv(tile_l, 128) * 128, 128)
    # Resident bytes per row of tile_n:
    #   2 inputs x 2 pipeline buffers x lane_pad x itemsize (dtype-aware)
    # + 2 output buffers (6 lanes pad to 128, f32)
    bytes_per_row = 2 * 2 * lane_pad * itemsize + 2 * 128 * 4
    if n_l_blocks > 1:
        bytes_per_row += 6 * 128 * 4              # lane-width f32 accumulators

    tile_n = vmem_budget // bytes_per_row
    tile_n = max(row_align, (tile_n // row_align) * row_align)
    tile_n = min(tile_n, pl.cdiv(N, row_align) * row_align)

    if two_tc:
        # Two TensorCores (v7x): guarantee >= 2 blocks on the "parallel" row
        # axis so the second core is not idle for small / medium N.
        cap_n = max(row_align, pl.cdiv(pl.cdiv(N, 2), row_align) * row_align)
        tile_n = min(tile_n, cap_n)
    # Single-TC parts (v5e / v6e): keep the largest tile that fits — shrinking
    # only multiplies the per-grid-step overhead and shrinks each DMA.
    return tile_n, tile_l, n_l_blocks


def _canonical_dtype(x):
    if x.dtype in (jnp.dtype(jnp.bfloat16), jnp.dtype(jnp.float16),
                   jnp.dtype(jnp.float32)):
        return x
    return x.astype(jnp.float32)


# ----------------------------------------------------------------------------
# Public wrapper
# ----------------------------------------------------------------------------
def diagram_stats(b, d, *, tile_n=None, tile_l=None, max_tile_l=1024):
    """Pallas implementation of DiagramStats.forward(b, d) -> (N, 6) f32.

    bf16 / f16 inputs are accepted (and preferred on HBM-bound parts such as
    v5e / f32-on-v6e); they are upcast to f32 inside the kernel.
    """
    assert b.shape == d.shape and b.ndim == 2
    N, L = b.shape
    b = _canonical_dtype(b)
    d = _canonical_dtype(d)
    itemsize = jnp.dtype(b.dtype).itemsize

    vmem_budget, vmem_limit, two_tc = _hw_vmem()
    auto_tn, auto_tl, _ = _choose_tiles(
        N, L, itemsize, max_tile_l=max_tile_l,
        vmem_budget=vmem_budget, two_tc=two_tc)
    if tile_l is None:
        tile_l = auto_tl
    if tile_n is None:
        tile_n = auto_tn
    row_align = 16 if itemsize == 2 else 8
    tile_n = max(row_align, (tile_n // row_align) * row_align)
    assert tile_l == L or tile_l % 128 == 0, \
        "tile_l must equal L or be a multiple of 128"

    n_l_blocks = pl.cdiv(L, tile_l)
    grid_rows = pl.cdiv(N, tile_n)
    out_shape = jax.ShapeDtypeStruct((N, 6), jnp.float32)

    if n_l_blocks == 1:
        return pl.pallas_call(
            _kernel_single,
            out_shape=out_shape,
            grid_spec=pltpu.PrefetchScalarGridSpec(
                num_scalar_prefetch=0,
                grid=(grid_rows,),
                in_specs=[pl.BlockSpec((tile_n, L), lambda i: (i, 0)),
                          pl.BlockSpec((tile_n, L), lambda i: (i, 0))],
                out_specs=pl.BlockSpec((tile_n, 6), lambda i: (i, 0))),
            compiler_params=pltpu.CompilerParams(
                dimension_semantics=("parallel",),
                vmem_limit_bytes=vmem_limit),
        )(b, d)

    kernel = functools.partial(_kernel_tiled, tile_l=tile_l, L=L)
    return pl.pallas_call(
        kernel,
        out_shape=out_shape,
        grid_spec=pltpu.PrefetchScalarGridSpec(
            num_scalar_prefetch=0,
            grid=(grid_rows, n_l_blocks),
            in_specs=[pl.BlockSpec((tile_n, tile_l), lambda i, k: (i, k)),
                      pl.BlockSpec((tile_n, tile_l), lambda i, k: (i, k))],
            out_specs=pl.BlockSpec((tile_n, 6), lambda i, k: (i, 0)),
            scratch_shapes=[pltpu.VMEM((tile_n, 128), jnp.float32)
                            for _ in range(6)]),
        compiler_params=pltpu.CompilerParams(
            dimension_semantics=("parallel", "arbitrary"),
            vmem_limit_bytes=vmem_limit),
    )(b, d)


# ----------------------------------------------------------------------------
# Pure-JAX reference (mirrors the PyTorch forward)
# ----------------------------------------------------------------------------
def _reference(b, d):
    b = b.astype(jnp.float32)
    d = d.astype(jnp.float32)
    p = jnp.abs(d - b)
    logp = jnp.log1p(p)
    f0 = jnp.sum(p, axis=-1)
    f1 = jnp.sum(b * p, axis=-1)
    f2 = jnp.sum(d * p, axis=-1)
    f3 = jnp.sum(b * logp, axis=-1)
    f4 = jnp.sum(d * logp, axis=-1)
    f5 = jnp.log(jnp.exp(-1.0)
                 + jnp.sum(jnp.exp(p - 1.0) * (p > 0), axis=-1)) + 1.0
    return jnp.stack([f0, f1, f2, f3, f4, f5], axis=-1)


if __name__ == "__main__":
    key = jax.random.PRNGKey(0)

    # Case 1: small persistence diagrams — single-block (no L tiling) path.
    k1, k2 = jax.random.split(key)
    N, L = 8, 16
    b1 = jax.random.uniform(k1, (N, L), dtype=jnp.float32)
    d1 = b1 + jnp.abs(jax.random.normal(k2, (N, L), dtype=jnp.float32))
    d1 = d1.at[:, 0].set(b1[:, 0])          # force some p == 0 entries (f5 mask)
    out1 = jax.block_until_ready(diagram_stats(b1, d1))
    ref1 = _reference(b1, d1)
    assert out1.shape == (N, 6)
    assert jnp.allclose(out1, ref1, rtol=1e-5, atol=1e-5), (out1, ref1)

    # Case 2: exercises the L-tiled accumulator path with ragged L and N
    # (tile_l < L with a partial, masked last block; N not a tile_n multiple).
    k3, k4 = jax.random.split(k2)
    N2, L2 = 10, 300
    b2 = jax.random.uniform(k3, (N2, L2), dtype=jnp.float32)
    d2 = b2 + jnp.abs(jax.random.normal(k4, (N2, L2), dtype=jnp.float32))
    d2 = d2.at[:, 5].set(b2[:, 5])
    out2 = jax.block_until_ready(diagram_stats(b2, d2, tile_n=16, tile_l=128))
    ref2 = _reference(b2, d2)
    assert out2.shape == (N2, 6)
    assert jnp.allclose(out2, ref2, rtol=1e-5, atol=1e-5), (out2, ref2)

    # Case 3: bf16 inputs (dtype-aware tiling / in-kernel upcast path).
    k5, k6 = jax.random.split(k4)
    N3, L3 = 12, 16
    b3 = jax.random.uniform(k5, (N3, L3), dtype=jnp.float32).astype(jnp.bfloat16)
    d3 = (b3.astype(jnp.float32)
          + jnp.abs(jax.random.normal(k6, (N3, L3), dtype=jnp.float32))
          ).astype(jnp.bfloat16)
    out3 = jax.block_until_ready(diagram_stats(b3, d3))
    ref3 = _reference(b3, d3)
    assert out3.shape == (N3, 6)
    assert jnp.allclose(out3, ref3, rtol=1e-4, atol=1e-4), (out3, ref3)

    print("KERNEL_OK")
</pallas_src>

<mosaic_0001>
module attributes {stable_mosaic.version = 11 : i64} {
  func.func @_kernel_single(%arg0: i32, %arg1: memref<8x16xf32, #tpu.memory_space<vmem>>, %arg2: memref<8x16xf32, #tpu.memory_space<vmem>>, %arg3: memref<8x6xf32, #tpu.memory_space<vmem>>) attributes {dimension_semantics = [#tpu.dimension_semantics<parallel>], iteration_bounds = array<i64: 1>, scalar_prefetch = 0 : i64, scratch_operands = 0 : i64, tpu.core_type = #tpu.core_type<tc>, window_params = [{transform_indices = @transform_0, window_bounds = array<i64: 8, 16>}, {transform_indices = @transform_1, window_bounds = array<i64: 8, 16>}, {transform_indices = @transform_2, window_bounds = array<i64: 8, 6>}]} {
    %c0 = arith.constant 0 : index
    %c0_0 = arith.constant 0 : index
    %0 = vector.load %arg1[%c0, %c0_0] : memref<8x16xf32, #tpu.memory_space<vmem>>, vector<8x16xf32>
    %c0_1 = arith.constant 0 : index
    %c0_2 = arith.constant 0 : index
    %1 = vector.load %arg2[%c0_1, %c0_2] : memref<8x16xf32, #tpu.memory_space<vmem>>, vector<8x16xf32>
    %2 = arith.subf %1, %0 : vector<8x16xf32>
    %3 = math.absf %2 : vector<8x16xf32>
    %4 = math.log1p %3 : vector<8x16xf32>
    %cst = arith.constant dense<0.000000e+00> : vector<8xf32>
    %5 = vector.multi_reduction <add>, %3, %cst [1] : vector<8x16xf32> to vector<8xf32>
    %6 = vector.shape_cast %5 : vector<8xf32> to vector<8x1xf32>
    %7 = arith.mulf %0, %3 : vector<8x16xf32>
    %cst_3 = arith.constant dense<0.000000e+00> : vector<8xf32>
    %8 = vector.multi_reduction <add>, %7, %cst_3 [1] : vector<8x16xf32> to vector<8xf32>
    %9 = vector.shape_cast %8 : vector<8xf32> to vector<8x1xf32>
    %10 = arith.mulf %1, %3 : vector<8x16xf32>
    %cst_4 = arith.constant dense<0.000000e+00> : vector<8xf32>
    %11 = vector.multi_reduction <add>, %10, %cst_4 [1] : vector<8x16xf32> to vector<8xf32>
    %12 = vector.shape_cast %11 : vector<8xf32> to vector<8x1xf32>
    %13 = arith.mulf %0, %4 : vector<8x16xf32>
    %cst_5 = arith.constant dense<0.000000e+00> : vector<8xf32>
    %14 = vector.multi_reduction <add>, %13, %cst_5 [1] : vector<8x16xf32> to vector<8xf32>
    %15 = vector.shape_cast %14 : vector<8xf32> to vector<8x1xf32>
    %16 = arith.mulf %1, %4 : vector<8x16xf32>
    %cst_6 = arith.constant dense<0.000000e+00> : vector<8xf32>
    %17 = vector.multi_reduction <add>, %16, %cst_6 [1] : vector<8x16xf32> to vector<8xf32>
    %18 = vector.shape_cast %17 : vector<8xf32> to vector<8x1xf32>
    %cst_7 = arith.constant 0.000000e+00 : f32
    %19 = vector.broadcast %cst_7 : f32 to vector<8x16xf32>
    %20 = arith.cmpf ogt, %3, %19 : vector<8x16xf32>
    %cst_8 = arith.constant 1.000000e+00 : f32
    %21 = vector.broadcast %cst_8 : f32 to vector<8x16xf32>
    %22 = arith.subf %3, %21 : vector<8x16xf32>
    %23 = math.exp %22 : vector<8x16xf32>
    %cst_9 = arith.constant 0.000000e+00 : f32
    %24 = vector.broadcast %cst_9 : f32 to vector<8x16xf32>
    %25 = arith.select %20, %23, %24 : vector<8x16xi1>, vector<8x16xf32>
    %cst_10 = arith.constant dense<0.000000e+00> : vector<8xf32>
    %26 = vector.multi_reduction <add>, %25, %cst_10 [1] : vector<8x16xf32> to vector<8xf32>
    %27 = vector.shape_cast %26 : vector<8xf32> to vector<8x1xf32>
    %c0_11 = arith.constant 0 : index
    %c0_12 = arith.constant 0 : index
    %28 = vector.load %arg3[%c0_11, %c0_12] : memref<8x6xf32, #tpu.memory_space<vmem>>, vector<8x1xf32>
    tpu.vector_store %arg3[%c0_11, %c0_12], %6 {strides = array<i32>} : memref<8x6xf32, #tpu.memory_space<vmem>>, vector<8x1xf32>,
    %c0_13 = arith.constant 0 : index
    %c1 = arith.constant 1 : index
    %29 = vector.load %arg3[%c0_13, %c1] : memref<8x6xf32, #tpu.memory_space<vmem>>, vector<8x1xf32>
    tpu.vector_store %arg3[%c0_13, %c1], %9 {strides = array<i32>} : memref<8x6xf32, #tpu.memory_space<vmem>>, vector<8x1xf32>,
    %c0_14 = arith.constant 0 : index
    %c2 = arith.constant 2 : index
    %30 = vector.load %arg3[%c0_14, %c2] : memref<8x6xf32, #tpu.memory_space<vmem>>, vector<8x1xf32>
    tpu.vector_store %arg3[%c0_14, %c2], %12 {strides = array<i32>} : memref<8x6xf32, #tpu.memory_space<vmem>>, vector<8x1xf32>,
    %c0_15 = arith.constant 0 : index
    %c3 = arith.constant 3 : index
    %31 = vector.load %arg3[%c0_15, %c3] : memref<8x6xf32, #tpu.memory_space<vmem>>, vector<8x1xf32>
    tpu.vector_store %arg3[%c0_15, %c3], %15 {strides = array<i32>} : memref<8x6xf32, #tpu.memory_space<vmem>>, vector<8x1xf32>,
    %c0_16 = arith.constant 0 : index
    %c4 = arith.constant 4 : index
    %32 = vector.load %arg3[%c0_16, %c4] : memref<8x6xf32, #tpu.memory_space<vmem>>, vector<8x1xf32>
    tpu.vector_store %arg3[%c0_16, %c4], %18 {strides = array<i32>} : memref<8x6xf32, #tpu.memory_space<vmem>>, vector<8x1xf32>,
    %cst_17 = arith.constant -1.000000e+00 : f32
    %33 = math.exp %cst_17 : f32
    %34 = vector.broadcast %33 : f32 to vector<8x1xf32>
    %35 = arith.addf %34, %27 : vector<8x1xf32>
    %36 = math.log %35 : vector<8x1xf32>
    %cst_18 = arith.constant 1.000000e+00 : f32
    %37 = vector.broadcast %cst_18 : f32 to vector<8x1xf32>
    %38 = arith.addf %36, %37 : vector<8x1xf32>
    %c0_19 = arith.constant 0 : index
    %c5 = arith.constant 5 : index
    %39 = vector.load %arg3[%c0_19, %c5] : memref<8x6xf32, #tpu.memory_space<vmem>>, vector<8x1xf32>
    tpu.vector_store %arg3[%c0_19, %c5], %38 {strides = array<i32>} : memref<8x6xf32, #tpu.memory_space<vmem>>, vector<8x1xf32>,
    return
  }
  func.func @transform_0(%arg0: i32) -> (i32, i32) {
    %c0_i32 = arith.constant 0 : i32
    %c0_i32_0 = arith.constant 0 : i32
    return %arg0, %c0_i32 : i32, i32
  }
  func.func @transform_1(%arg0: i32) -> (i32, i32) {
    %c0_i32 = arith.constant 0 : i32
    %c0_i32_0 = arith.constant 0 : i32
    return %arg0, %c0_i32 : i32, i32
  }
  func.func @transform_2(%arg0: i32) -> (i32, i32) {
    %c0_i32 = arith.constant 0 : i32
    %c0_i32_0 = arith.constant 0 : i32
    return %arg0, %c0_i32 : i32, i32
  }
}

</mosaic_0001>

<llo_original>
// kernel: tpu_custom_call.1
$region0: #{tpu_custom_call.1}
  #allocation0 [shape = 'u32[]', space=smem, size = 0x4, offset = 0x4, fixed_abs, tag = 'smem constant byte address 0x4 - core index']
  #allocation1 [shape = 'u32[72,128]{1,0:T(1,128)}', space=vmem, size = 0x9000, scoped, tag = 'internal scratch']
  %s0 = inlined_call_operand.hbm [shape: f32[8,16], index: 0, kind: input, shape index: {}]
  %s1 = inlined_call_operand.hbm [shape: f32[8,16], index: 1, kind: input, shape index: {}]
  %s2 = inlined_call_operand.hbm [shape: f32[8,6], index: 2, kind: output, shape index: {}]
  %s3 = sld [smem:[#allocation0]]
  $region26: #{tpu_custom_call.1} parent=0
    _
  %s5 = ssub.s32 1, %s3
  %s6 = scalar_select 0, %s5, %s3
  $region1: #{tpu_custom_call.1} parent=0
    #allocation2 [shape = 'u8[4096]{0}', space=vmem, size = 0x1000, scoped, tag = 'input window, operand 0, single buffered']
    #allocation3 [shape = 's32[1]{0}', space=sflag, size = 0x4, scoped, tag = 'scoped memory for tpu_custom_call.1']
    #allocation4 [shape = 's32[1]{0}', space=sflag, size = 0x4, scoped, tag = 'scoped memory for tpu_custom_call.1']
    #allocation5 [shape = 'u8[4096]{0}', space=vmem, size = 0x1000, scoped, tag = 'input window, operand 1, single buffered']
    #allocation6 [shape = 's32[1]{0}', space=sflag, size = 0x4, scoped, tag = 'scoped memory for tpu_custom_call.1']
    #allocation7 [shape = 'u8[4096]{0}', space=vmem, size = 0x1000, scoped, tag = 'output window, operand 0, single buffered']
    %7 = vsyncpa [#allocation3], 0
    %8 = vsyncpa [#allocation6], 0
    %9 = vsyncpa [#allocation4], 0
    // Predicated region
    $region2: #{tpu_custom_call.1} parent=1 // pred_check
      _
    $region3: #{tpu_custom_call.1} parent=1 // pred_check_branch
      %11 = sbr.rel (0) target = $region5
    $region4: #{tpu_custom_call.1} parent=1 // pred_region
      %13 = vsyncadd [#allocation3], 0
      %s15 = sshll.u32 %s0, 4
      %s16 = int_to_ptr.hbm [resolvable:$true] %s15
      %s17 = sshll.u32 [#allocation2], 4
      %s18 = int_to_ptr.vmem [resolvable:$true] %s17
      %20 = dma.hbm_to_vmem [thread:$0]  %s16, 128, %s18, [#allocation3]
    $region5: #{tpu_custom_call.1} parent=1 // pred_fallthru
      _
    // Predicated region
    $region6: #{tpu_custom_call.1} parent=1 // pred_check
      _
    $region7: #{tpu_custom_call.1} parent=1 // pred_check_branch
      %22 = sbr.rel (0) target = $region9
    $region8: #{tpu_custom_call.1} parent=1 // pred_region
      %24 = vsyncadd [#allocation6], 0
      %s26 = sshll.u32 %s1, 4
      %s27 = int_to_ptr.hbm [resolvable:$true] %s26
      %s28 = sshll.u32 [#allocation5], 4
      %s29 = int_to_ptr.vmem [resolvable:$true] %s28
      %31 = dma.hbm_to_vmem [thread:$0]  %s27, 128, %s29, [#allocation6]
    $region9: #{tpu_custom_call.1} parent=1 // pred_fallthru
      _
    // Predicated region
    $region10: #{tpu_custom_call.1} parent=1 // pred_check
      _
    $region11: #{tpu_custom_call.1} parent=1 // pred_check_branch
      %33 = sbr.rel (0) target = $region13
    $region12: #{tpu_custom_call.1} parent=1 // pred_region
      %35 = dma.done [#allocation3], 128
    $region13: #{tpu_custom_call.1} parent=1 // pred_fallthru
      _
    // Predicated region
    $region14: #{tpu_custom_call.1} parent=1 // pred_check
      _
    $region15: #{tpu_custom_call.1} parent=1 // pred_check_branch
      %37 = sbr.rel (0) target = $region17
    $region16: #{tpu_custom_call.1} parent=1 // pred_region
      %39 = dma.done [#allocation6], 128
    $region17: #{tpu_custom_call.1} parent=1 // pred_fallthru
      _
    %v40 = vld [vmem:[#allocation2] sm:$0xff]
    %v41 = vld [vmem:[#allocation5] sm:$0xff]
    %v42 = vsub.f32 %v41, %v40
    %v43 = vand.u32 2147483647, %v42
    %v44 = vadd.f32 %v43, 1.0
    %v45 = vlog2.pop %v44
    %v46 = vmul.f32 %v45, 0.6931472
    %v47 = vmul.f32 -0.5, %v43
    %v48 = vadd.f32 %v47, 1.0
    %v49 = vmul.f32 %v48, %v43
    %v50 = vand.u32 2147483647, %v43
    %vm51 = vcmp.lt.f32.partialorder %v50, 0.0004427343
    %v52 = vsel %vm51, %v49, %v46
    %vm53 = vcmask 130048
    %v54 = vsel %vm53, %v43, 0.0
    %55 = vadd.xlane.f32.xlu0 %v54
    %v56 = vpop.xlane.xlu0 %55
    %v57 = vmul.f32 %v40, %v43
    %v58 = vsel %vm53, %v57, 0.0
    %59 = vadd.xlane.f32.xlu0 %v58
    %v60 = vpop.xlane.xlu0 %59
    %v61 = vmul.f32 %v41, %v43
    %v62 = vsel %vm53, %v61, 0.0
    %63 = vadd.xlane.f32.xlu0 %v62
    %v64 = vpop.xlane.xlu0 %63
    %v65 = vmul.f32 %v40, %v52
    %v66 = vsel %vm53, %v65, 0.0
    %67 = vadd.xlane.f32.xlu0 %v66
    %v68 = vpop.xlane.xlu0 %67
    %v69 = vmul.f32 %v41, %v52
    %v70 = vsel %vm53, %v69, 0.0
    %71 = vadd.xlane.f32.xlu0 %v70
    %v72 = vpop.xlane.xlu0 %71
    %vm73 = vcmp.gt.f32.partialorder %v43, 0.0
    %v74 = vsub.f32 %v43, 1.0
    %v75 = vmul.f32 %v74, 1.442695
    %v76 = vpow.pop %v75
    %v77 = vsel %vm73, %v76, 0.0
    %v78 = vsel %vm53, %v77, 0.0
    %79 = vadd.xlane.f32.xlu0 %v78
    %v80 = vpop.xlane.xlu0 %79
    %vm81 = vcmask 7168
    %82 = vst.msk [vmem:[#allocation7] sm:$0xff] %vm81, %v56
    %vm83 = vcmask 15368
    %84 = vst.msk [vmem:[#allocation7] sm:$0xff] %vm83, %v60
    %vm85 = vcmask 23568
    %86 = vst.msk [vmem:[#allocation7] sm:$0xff] %vm85, %v64
    %vm87 = vcmask 31768
    %88 = vst.msk [vmem:[#allocation7] sm:$0xff] %vm87, %v68
    %vm89 = vcmask 39968
    %90 = vst.msk [vmem:[#allocation7] sm:$0xff] %vm89, %v72
    %v91 = vadd.f32 %v80, 0.36787945
    %v92 = vlog2.pop %v91
    %v93 = vmul.f32 %v92, 0.6931472
    %v94 = vadd.f32 %v93, 1.0
    %vm95 = vcmask 48168
    %96 = vst.msk [vmem:[#allocation7] sm:$0xff] %vm95, %v94
    // Predicated region
    $region18: #{tpu_custom_call.1} parent=1 // pred_check
      _
    $region19: #{tpu_custom_call.1} parent=1 // pred_check_branch
      %98 = sbr.rel (0) target = $region21
    $region20: #{tpu_custom_call.1} parent=1 // pred_region
      %100 = vsyncadd [#allocation4], 0
      %s102 = sshll.u32 [#allocation7], 4
      %s103 = int_to_ptr.vmem [resolvable:$true] %s102
      %s104 = sshll.u32 %s2, 4
      %s105 = int_to_ptr.hbm [resolvable:$true] %s104
      %107 = dma.vmem_to_hbm [thread:$0]  %s103, 128, %s105, [#allocation4]
    $region21: #{tpu_custom_call.1} parent=1 // pred_fallthru
      _
    // Predicated region
    $region22: #{tpu_custom_call.1} parent=1 // pred_check
      _
    $region23: #{tpu_custom_call.1} parent=1 // pred_check_branch
      %109 = sbr.rel (0) target = $region25
    $region24: #{tpu_custom_call.1} parent=1 // pred_region
      %111 = dma.done [#allocation4], 128
    $region25: #{tpu_custom_call.1} parent=1 // pred_fallthru
      _
    %112 = vsyncpa [#allocation3], 1
    %113 = vsyncpa [#allocation6], 1
    %114 = vsyncpa [#allocation4], 1

</llo_original>
